<compile_context>
chip_gen: v7x
topology: tpu7x:2x2x1
jax: 0.10.0
libtpu: 0.0.40
codegen_flags: <defaults>
</compile_context>

<pallas_src>
import jax
import jax.numpy as jnp
from jax.experimental import pallas as pl
from jax.experimental.pallas import tpu as pltpu

FILTER_SIZES = (3, 4, 5)
NCOL = 128   # padded lane axis holding all filter branches (needs 3*F <= NCOL)
CPAD = 128   # padded logits lane axis (needs C <= CPAD); keep >=128 for unmasked vst


def _round_up(x, m):
    return ((x + m - 1) // m) * m


def textcnn_kernel(emb_ref, wcat_ref, bcat_ref, mask_ref, fcw_ref, fcb_ref, out_ref):
    TB, L, E = emb_ref.shape
    R = TB * L
    smax = wcat_ref.shape[0]
    ncol = wcat_ref.shape[-1]

    # (TB, L, E) bf16 -> (R, E): free layout merge (L padded to the bf16 sublane pack).
    x_bf = emb_ref[...].reshape(R, E)
    # Rolls run in f32 (known-good Mosaic lowering; bf16<->f32 round trip is exact).
    x_f32 = x_bf.astype(jnp.float32)

    # Per-shift MXU accumulation: conv[r] = sum_s x[r+s] @ W[s].  Only one rolled slab
    # is ever live; no lane concat, no ragged-K matmul.
    conv = jnp.dot(x_bf, wcat_ref[0], preferred_element_type=jnp.float32)
    for s in range(1, smax):
        xs = pltpu.roll(x_f32, R - s, axis=0)               # row r -> x[r + s (mod R)]
        conv = conv + jnp.dot(xs.astype(jnp.bfloat16), wcat_ref[s],
                              preferred_element_type=jnp.float32)

    conv = jnp.maximum(conv + bcat_ref[...], 0.0)            # bias + relu (f32 VPU)
    # Precomputed (L, ncol) validity mask zeroes invalid / cross-sample-wrapped rows per
    # branch (relu >= 0, so a 0-mask before max-over-time is safe).
    conv = conv.reshape(TB, L, ncol) * mask_ref[...]
    pooled = jnp.max(conv, axis=1)                           # (TB, ncol) max-over-time

    # TODO(synk): dropout(p=0.5) is identity in eval mode; training-mode masking omitted.
    logits = jnp.dot(pooled.astype(jnp.bfloat16), fcw_ref[...],
                     preferred_element_type=jnp.float32)     # fused FC, lane-dense
    out_ref[...] = logits + fcb_ref[...]                     # (TB, CPAD)


def _tile_vmem_bytes(TB, L, E, smax):
    emb = 2 * TB * L * E * 2              # double-buffered bf16 emb tile
    xtmp = TB * L * E * (4 + 4 + 2)       # f32 copy + one live rolled slab + bf16 cast
    conv = 2 * TB * L * NCOL * 4          # f32 conv accumulator (+ masked headroom)
    outb = 2 * TB * CPAD * 4              # double-buffered f32 logits tile
    wts = 2 * (smax * E * NCOL * 2 + NCOL * CPAD * 2 + L * NCOL * 4 + 2 * NCOL * 4)
    return emb + xtmp + conv + outb + wts


def textcnn_forward(emb_x, params, *, block_b=256, vmem_budget=20 * 1024 * 1024):
    """emb_x: (B, L, E) float32 embedded tokens -> (B, C) logits."""
    B, L, E = emb_x.shape
    F = params['b3'].shape[-1]
    C = params['fc_b'].shape[-1]
    smax = max(FILTER_SIZES)
    assert len(FILTER_SIZES) * F <= NCOL and C <= CPAD
    assert L >= smax, "sequence length must be >= max filter size (as PyTorch Conv2d requires)"

    # ---- fuse + lane-pad parameters (cheap; constant-folds under jit) ----
    # conv weights: (fs, E, F) per branch -> (smax, E, NCOL); branch bi lives at columns
    # [bi*F, (bi+1)*F), shift s at wcat[s]; zeros elsewhere.
    wcat = jnp.zeros((smax, E, NCOL), jnp.float32)
    bcat = jnp.zeros((1, NCOL), jnp.float32)
    for bi, fs in enumerate(FILTER_SIZES):
        wcat = wcat.at[:fs, :, bi * F:(bi + 1) * F].set(params[f'w{fs}'])
        bcat = bcat.at[:, bi * F:(bi + 1) * F].set(params[f'b{fs}'])
    fcw = jnp.zeros((NCOL, CPAD), jnp.float32)
    fcw = fcw.at[:len(FILTER_SIZES) * F, :C].set(params['fc_w'])
    fcb = jnp.zeros((1, CPAD), jnp.float32).at[:, :C].set(params['fc_b'])

    # ---- pad L to the bf16 sublane pack so the in-kernel reshape is a free merge ----
    L_pad = _round_up(L, 16)
    if L_pad != L:
        emb_x = jnp.pad(emb_x, ((0, 0), (0, L_pad - L), (0, 0)))

    # per-branch time-validity mask (static in L / filter_sizes / F): valid t < L-fs+1
    t_idx = jnp.arange(L_pad)
    mask = jnp.zeros((L_pad, NCOL), jnp.float32)
    for bi, fs in enumerate(FILTER_SIZES):
        valid = (t_idx < (L - fs + 1)).astype(jnp.float32)
        mask = mask.at[:, bi * F:(bi + 1) * F].set(
            jnp.broadcast_to(valid[:, None], (L_pad, F)))

    # ---- batch tiling: fit the VMEM budget, keep >= 2 grid steps when B allows ----
    TB = min(block_b, _round_up(B, 8))
    while TB > 8 and _tile_vmem_bytes(TB, L_pad, E, smax) > vmem_budget:
        TB = _round_up(TB // 2, 8)
    while _round_up(B, TB) // TB < 2 and TB >= 16:        # v7x: 2 TensorCores / chip
        TB = _round_up(TB // 2, 8)
    Bp = _round_up(B, TB)
    if Bp != B:
        emb_x = jnp.pad(emb_x, ((0, Bp - B), (0, 0), (0, 0)))
    emb_bf = emb_x.astype(jnp.bfloat16)                    # halve HBM->VMEM bytes

    est = _tile_vmem_bytes(TB, L_pad, E, smax)
    vmem_limit = None
    if est * 3 // 2 > 16 * 1024 * 1024:                    # only override above v5e default
        vmem_limit = min(est * 3 // 2, 100 * 1024 * 1024)

    out = pl.pallas_call(
        textcnn_kernel,
        out_shape=jax.ShapeDtypeStruct((Bp, CPAD), jnp.float32),
        grid=(Bp // TB,),
        in_specs=[
            pl.BlockSpec((TB, L_pad, E), lambda i: (i, 0, 0)),     # streamed emb tile
            pl.BlockSpec((smax, E, NCOL), lambda i: (0, 0, 0)),    # VMEM-resident weights
            pl.BlockSpec((1, NCOL), lambda i: (0, 0)),             # conv bias
            pl.BlockSpec((L_pad, NCOL), lambda i: (0, 0)),         # precomputed time mask
            pl.BlockSpec((NCOL, CPAD), lambda i: (0, 0)),          # fc weight
            pl.BlockSpec((1, CPAD), lambda i: (0, 0)),             # fc bias
        ],
        out_specs=pl.BlockSpec((TB, CPAD), lambda i: (i, 0)),      # lane-dense output
        compiler_params=pltpu.CompilerParams(
            dimension_semantics=("parallel",),
            vmem_limit_bytes=vmem_limit),
    )(emb_bf, wcat.astype(jnp.bfloat16), bcat, mask, fcw.astype(jnp.bfloat16), fcb)
    return out[:B, :C]


def init_params(key, vocab_size, emb_dim, num_filters, num_classes):
    ks = jax.random.split(key, 9)
    emb_table = 0.1 * jax.random.normal(ks[0], (vocab_size, emb_dim), jnp.float32)
    emb_table = emb_table.at[0].set(0.0)                       # padding_idx=0
    params = {'emb': emb_table}
    for i, fs in enumerate(FILTER_SIZES):
        # PyTorch conv weight (F, 1, fs, E)  ->  stored here as (fs, E, F)
        params[f'w{fs}'] = 0.1 * jax.random.normal(
            ks[1 + 2 * i], (fs, emb_dim, num_filters), jnp.float32)
        params[f'b{fs}'] = 0.1 * jax.random.normal(
            ks[2 + 2 * i], (1, num_filters), jnp.float32)
    # PyTorch fc weight (C, 3F) -> stored as (3F, C)
    params['fc_w'] = 0.1 * jax.random.normal(
        ks[7], (num_filters * len(FILTER_SIZES), num_classes), jnp.float32)
    params['fc_b'] = 0.1 * jax.random.normal(ks[8], (1, num_classes), jnp.float32)
    return params


def reference_forward(emb_x, params):
    """Pure-JAX f32 reference mirroring the PyTorch forward (eval mode)."""
    pooled = []
    L = emb_x.shape[1]
    for fs in FILTER_SIZES:
        T = L - fs + 1
        w = params[f'w{fs}']
        acc = jnp.zeros((emb_x.shape[0], T, w.shape[-1]), jnp.float32)
        for s in range(fs):
            acc = acc + jnp.einsum('bte,ef->btf', emb_x[:, s:s + T, :], w[s])
        acc = jnp.maximum(acc + params[f'b{fs}'][None], 0.0)
        pooled.append(jnp.max(acc, axis=1))
    cat = jnp.concatenate(pooled, axis=-1)
    return cat @ params['fc_w'] + params['fc_b']


if __name__ == "__main__":
    B, L = 2, 16
    vocab_size, emb_dim, num_filters, num_classes = 50, 32, 16, 2

    key = jax.random.PRNGKey(0)
    k_tok, k_par = jax.random.split(key)
    params = init_params(k_par, vocab_size, emb_dim, num_filters, num_classes)

    tokens = jax.random.randint(k_tok, (B, L), 0, vocab_size, dtype=jnp.int32)
    # Embedding lookup (gather) is glue, done in plain JAX.
    emb_x = jnp.take(params['emb'], tokens, axis=0)            # (B, L, E)

    logits = jax.block_until_ready(textcnn_forward(emb_x, params))
    ref = jax.block_until_ready(reference_forward(emb_x, params))

    assert logits.shape == (B, num_classes)
    assert jnp.allclose(logits, ref, rtol=2e-2, atol=2e-2), (logits, ref)

    print("KERNEL_OK")
</pallas_src>

<mosaic_0001>
module attributes {stable_mosaic.version = 11 : i64} {
  func.func @textcnn_kernel(%arg0: i32, %arg1: memref<8x16x32xbf16, #tpu.memory_space<vmem>>, %arg2: memref<5x32x128xbf16, #tpu.memory_space<vmem>>, %arg3: memref<1x128xf32, #tpu.memory_space<vmem>>, %arg4: memref<16x128xf32, #tpu.memory_space<vmem>>, %arg5: memref<128x128xbf16, #tpu.memory_space<vmem>>, %arg6: memref<1x128xf32, #tpu.memory_space<vmem>>, %arg7: memref<8x128xf32, #tpu.memory_space<vmem>>) attributes {dimension_semantics = [#tpu.dimension_semantics<parallel>], iteration_bounds = array<i64: 1>, scalar_prefetch = 0 : i64, scratch_operands = 0 : i64, tpu.core_type = #tpu.core_type<tc>, window_params = [{transform_indices = @transform_0, window_bounds = array<i64: 8, 16, 32>}, {pipeline_mode = #tpu.pipeline_mode<synchronous>, transform_indices = @transform_1, window_bounds = array<i64: 5, 32, 128>}, {pipeline_mode = #tpu.pipeline_mode<synchronous>, transform_indices = @transform_2, window_bounds = array<i64: 1, 128>}, {pipeline_mode = #tpu.pipeline_mode<synchronous>, transform_indices = @transform_3, window_bounds = array<i64: 16, 128>}, {pipeline_mode = #tpu.pipeline_mode<synchronous>, transform_indices = @transform_4, window_bounds = array<i64: 128, 128>}, {pipeline_mode = #tpu.pipeline_mode<synchronous>, transform_indices = @transform_5, window_bounds = array<i64: 1, 128>}, {transform_indices = @transform_6, window_bounds = array<i64: 8, 128>}]} {
    %c0 = arith.constant 0 : index
    %c0_0 = arith.constant 0 : index
    %c0_1 = arith.constant 0 : index
    %0 = vector.load %arg1[%c0, %c0_0, %c0_1] : memref<8x16x32xbf16, #tpu.memory_space<vmem>>, vector<8x16x32xbf16>
    %1 = vector.shape_cast %0 : vector<8x16x32xbf16> to vector<128x32xbf16>
    %2 = arith.extf %1 : vector<128x32xbf16> to vector<128x32xf32>
    %c0_2 = arith.constant 0 : index
    %c0_3 = arith.constant 0 : index
    %c0_4 = arith.constant 0 : index
    %3 = vector.load %arg2[%c0_2, %c0_3, %c0_4] : memref<5x32x128xbf16, #tpu.memory_space<vmem>>, vector<1x32x128xbf16>
    %4 = vector.shape_cast %3 : vector<1x32x128xbf16> to vector<32x128xbf16>
    %cst = arith.constant dense<0.000000e+00> : vector<128x128xf32>
    %5 = tpu.matmul %1, %4, %cst {dimension_numbers = #tpu.dot_dimension_numbers<[1], [0], [0], [1], [0, 0, 1, 1], [], []>} : vector<128x32xbf16>, vector<32x128xbf16>, vector<128x128xf32> -> vector<128x128xf32>
    %c127_i32 = arith.constant 127 : i32
    %6 = tpu.dynamic_rotate %2 by %c127_i32 dim 0 : vector<128x32xf32>, i32 -> vector<128x32xf32>
    %7 = arith.truncf %6 : vector<128x32xf32> to vector<128x32xbf16>
    %c1 = arith.constant 1 : index
    %c0_5 = arith.constant 0 : index
    %c0_6 = arith.constant 0 : index
    %8 = vector.load %arg2[%c1, %c0_5, %c0_6] : memref<5x32x128xbf16, #tpu.memory_space<vmem>>, vector<1x32x128xbf16>
    %9 = vector.shape_cast %8 : vector<1x32x128xbf16> to vector<32x128xbf16>
    %cst_7 = arith.constant dense<0.000000e+00> : vector<128x128xf32>
    %10 = tpu.matmul %7, %9, %cst_7 {dimension_numbers = #tpu.dot_dimension_numbers<[1], [0], [0], [1], [0, 0, 1, 1], [], []>} : vector<128x32xbf16>, vector<32x128xbf16>, vector<128x128xf32> -> vector<128x128xf32>
    %11 = arith.addf %5, %10 : vector<128x128xf32>
    %c126_i32 = arith.constant 126 : i32
    %12 = tpu.dynamic_rotate %2 by %c126_i32 dim 0 : vector<128x32xf32>, i32 -> vector<128x32xf32>
    %13 = arith.truncf %12 : vector<128x32xf32> to vector<128x32xbf16>
    %c2 = arith.constant 2 : index
    %c0_8 = arith.constant 0 : index
    %c0_9 = arith.constant 0 : index
    %14 = vector.load %arg2[%c2, %c0_8, %c0_9] : memref<5x32x128xbf16, #tpu.memory_space<vmem>>, vector<1x32x128xbf16>
    %15 = vector.shape_cast %14 : vector<1x32x128xbf16> to vector<32x128xbf16>
    %cst_10 = arith.constant dense<0.000000e+00> : vector<128x128xf32>
    %16 = tpu.matmul %13, %15, %cst_10 {dimension_numbers = #tpu.dot_dimension_numbers<[1], [0], [0], [1], [0, 0, 1, 1], [], []>} : vector<128x32xbf16>, vector<32x128xbf16>, vector<128x128xf32> -> vector<128x128xf32>
    %17 = arith.addf %11, %16 : vector<128x128xf32>
    %c125_i32 = arith.constant 125 : i32
    %18 = tpu.dynamic_rotate %2 by %c125_i32 dim 0 : vector<128x32xf32>, i32 -> vector<128x32xf32>
    %19 = arith.truncf %18 : vector<128x32xf32> to vector<128x32xbf16>
    %c3 = arith.constant 3 : index
    %c0_11 = arith.constant 0 : index
    %c0_12 = arith.constant 0 : index
    %20 = vector.load %arg2[%c3, %c0_11, %c0_12] : memref<5x32x128xbf16, #tpu.memory_space<vmem>>, vector<1x32x128xbf16>
    %21 = vector.shape_cast %20 : vector<1x32x128xbf16> to vector<32x128xbf16>
    %cst_13 = arith.constant dense<0.000000e+00> : vector<128x128xf32>
    %22 = tpu.matmul %19, %21, %cst_13 {dimension_numbers = #tpu.dot_dimension_numbers<[1], [0], [0], [1], [0, 0, 1, 1], [], []>} : vector<128x32xbf16>, vector<32x128xbf16>, vector<128x128xf32> -> vector<128x128xf32>
    %23 = arith.addf %17, %22 : vector<128x128xf32>
    %c124_i32 = arith.constant 124 : i32
    %24 = tpu.dynamic_rotate %2 by %c124_i32 dim 0 : vector<128x32xf32>, i32 -> vector<128x32xf32>
    %25 = arith.truncf %24 : vector<128x32xf32> to vector<128x32xbf16>
    %c4 = arith.constant 4 : index
    %c0_14 = arith.constant 0 : index
    %c0_15 = arith.constant 0 : index
    %26 = vector.load %arg2[%c4, %c0_14, %c0_15] : memref<5x32x128xbf16, #tpu.memory_space<vmem>>, vector<1x32x128xbf16>
    %27 = vector.shape_cast %26 : vector<1x32x128xbf16> to vector<32x128xbf16>
    %cst_16 = arith.constant dense<0.000000e+00> : vector<128x128xf32>
    %28 = tpu.matmul %25, %27, %cst_16 {dimension_numbers = #tpu.dot_dimension_numbers<[1], [0], [0], [1], [0, 0, 1, 1], [], []>} : vector<128x32xbf16>, vector<32x128xbf16>, vector<128x128xf32> -> vector<128x128xf32>
    %29 = arith.addf %23, %28 : vector<128x128xf32>
    %c0_17 = arith.constant 0 : index
    %c0_18 = arith.constant 0 : index
    %30 = vector.load %arg3[%c0_17, %c0_18] : memref<1x128xf32, #tpu.memory_space<vmem>>, vector<1x128xf32>
    %31 = vector.broadcast %30 : vector<1x128xf32> to vector<128x128xf32>
    %32 = arith.addf %29, %31 : vector<128x128xf32>
    %cst_19 = arith.constant 0.000000e+00 : f32
    %33 = vector.broadcast %cst_19 : f32 to vector<128x128xf32>
    %34 = arith.maximumf %32, %33 : vector<128x128xf32>
    %35 = vector.shape_cast %34 : vector<128x128xf32> to vector<8x16x128xf32>
    %c0_20 = arith.constant 0 : index
    %c0_21 = arith.constant 0 : index
    %36 = vector.load %arg4[%c0_20, %c0_21] : memref<16x128xf32, #tpu.memory_space<vmem>>, vector<16x128xf32>
    %37 = vector.shape_cast %36 : vector<16x128xf32> to vector<1x16x128xf32>
    %38 = vector.broadcast %37 : vector<1x16x128xf32> to vector<8x16x128xf32>
    %39 = arith.mulf %35, %38 : vector<8x16x128xf32>
    %cst_22 = arith.constant dense<0xFF800000> : vector<8x128xf32>
    %40 = vector.multi_reduction <maximumf>, %39, %cst_22 [1] : vector<8x16x128xf32> to vector<8x128xf32>
    %41 = arith.truncf %40 : vector<8x128xf32> to vector<8x128xbf16>
    %c0_23 = arith.constant 0 : index
    %c0_24 = arith.constant 0 : index
    %42 = vector.load %arg5[%c0_23, %c0_24] : memref<128x128xbf16, #tpu.memory_space<vmem>>, vector<128x128xbf16>
    %cst_25 = arith.constant dense<0.000000e+00> : vector<8x128xf32>
    %43 = tpu.matmul %41, %42, %cst_25 {dimension_numbers = #tpu.dot_dimension_numbers<[1], [0], [0], [1], [0, 0, 1, 1], [], []>} : vector<8x128xbf16>, vector<128x128xbf16>, vector<8x128xf32> -> vector<8x128xf32>
    %c0_26 = arith.constant 0 : index
    %c0_27 = arith.constant 0 : index
    %44 = vector.load %arg6[%c0_26, %c0_27] : memref<1x128xf32, #tpu.memory_space<vmem>>, vector<1x128xf32>
    %45 = vector.broadcast %44 : vector<1x128xf32> to vector<8x128xf32>
    %46 = arith.addf %43, %45 : vector<8x128xf32>
    %c0_28 = arith.constant 0 : index
    %c0_29 = arith.constant 0 : index
    %47 = vector.load %arg7[%c0_28, %c0_29] : memref<8x128xf32, #tpu.memory_space<vmem>>, vector<8x128xf32>
    tpu.vector_store %arg7[%c0_28, %c0_29], %46 {strides = array<i32>} : memref<8x128xf32, #tpu.memory_space<vmem>>, vector<8x128xf32>,
    return
  }
  func.func @transform_0(%arg0: i32) -> (i32, i32, i32) {
    %c0_i32 = arith.constant 0 : i32
    %c0_i32_0 = arith.constant 0 : i32
    %c0_i32_1 = arith.constant 0 : i32
    return %arg0, %c0_i32, %c0_i32_0 : i32, i32, i32
  }
  func.func @transform_1(%arg0: i32) -> (i32, i32, i32) {
    %c0_i32 = arith.constant 0 : i32
    %c0_i32_0 = arith.constant 0 : i32
    %c0_i32_1 = arith.constant 0 : i32
    %c0_i32_2 = arith.constant 0 : i32
    return %c0_i32, %c0_i32_0, %c0_i32_1 : i32, i32, i32
  }
  func.func @transform_2(%arg0: i32) -> (i32, i32) {
    %c0_i32 = arith.constant 0 : i32
    %c0_i32_0 = arith.constant 0 : i32
    %c0_i32_1 = arith.constant 0 : i32
    return %c0_i32, %c0_i32_0 : i32, i32
  }
  func.func @transform_3(%arg0: i32) -> (i32, i32) {
    %c0_i32 = arith.constant 0 : i32
    %c0_i32_0 = arith.constant 0 : i32
    %c0_i32_1 = arith.constant 0 : i32
    return %c0_i32, %c0_i32_0 : i32, i32
  }
  func.func @transform_4(%arg0: i32) -> (i32, i32) {
    %c0_i32 = arith.constant 0 : i32
    %c0_i32_0 = arith.constant 0 : i32
    %c0_i32_1 = arith.constant 0 : i32
    return %c0_i32, %c0_i32_0 : i32, i32
  }
  func.func @transform_5(%arg0: i32) -> (i32, i32) {
    %c0_i32 = arith.constant 0 : i32
    %c0_i32_0 = arith.constant 0 : i32
    %c0_i32_1 = arith.constant 0 : i32
    return %c0_i32, %c0_i32_0 : i32, i32
  }
  func.func @transform_6(%arg0: i32) -> (i32, i32) {
    %c0_i32 = arith.constant 0 : i32
    %c0_i32_0 = arith.constant 0 : i32
    return %arg0, %c0_i32 : i32, i32
  }
}

</mosaic_0001>

<llo_original>
// kernel: tpu_custom_call.1
$region0: #{tpu_custom_call.1}
  #allocation0 [shape = 'u32[]', space=smem, size = 0x4, offset = 0x4, fixed_abs, tag = 'smem constant byte address 0x4 - core index']
  #allocation1 [shape = 'u32[144,128]{1,0:T(1,128)}', space=vmem, size = 0x12000, scoped, tag = 'internal scratch']
  %s0 = inlined_call_operand.hbm [shape: bf16[8,16,32], index: 0, kind: input, shape index: {}]
  %s1 = inlined_call_operand.hbm [shape: bf16[5,32,128], index: 1, kind: input, shape index: {}]
  %s2 = inlined_call_operand.vmem [shape: f32[1,128], index: 2, kind: input, shape index: {}]
  %s3 = inlined_call_operand.hbm [shape: f32[16,128], index: 3, kind: input, shape index: {}]
  %s4 = inlined_call_operand.hbm [shape: bf16[128,128], index: 4, kind: input, shape index: {}]
  %s5 = inlined_call_operand.vmem [shape: f32[1,128], index: 5, kind: input, shape index: {}]
  %s6 = inlined_call_operand.hbm [shape: f32[8,128], index: 6, kind: output, shape index: {}]
  %s7 = sld [smem:[#allocation0]]
  $region50: #{tpu_custom_call.1} parent=0
    _
  %s9 = ssub.s32 1, %s7
  %s10 = scalar_select 0, %s9, %s7
  $region1: #{tpu_custom_call.1} parent=0
    #allocation2 [shape = 'u8[32768]{0}', space=vmem, size = 0x8000, scoped, tag = 'input window, operand 0, single buffered']
    #allocation3 [shape = 's32[1]{0}', space=sflag, size = 0x4, scoped, tag = 'scoped memory for tpu_custom_call.1']
    #allocation4 [shape = 's32[1]{0}', space=sflag, size = 0x4, scoped, tag = 'scoped memory for tpu_custom_call.1']
    #allocation5 [shape = 'u8[40960]{0}', space=vmem, size = 0xa000, scoped, tag = 'input window, operand 1, single buffered']
    #allocation6 [shape = 's32[1]{0}', space=sflag, size = 0x4, scoped, tag = 'scoped memory for tpu_custom_call.1']
    #allocation7 [shape = 'u8[8192]{0}', space=vmem, size = 0x2000, scoped, tag = 'input window, operand 3, single buffered']
    #allocation8 [shape = 'u8[32768]{0}', space=vmem, size = 0x8000, scoped, tag = 'input window, operand 4, single buffered']
    #allocation9 [shape = 's32[1]{0}', space=sflag, size = 0x4, scoped, tag = 'scoped memory for tpu_custom_call.1']
    #allocation10 [shape = 'u8[4096]{0}', space=vmem, size = 0x1000, scoped, tag = 'output window, operand 0, single buffered']
    %11 = vsyncpa [#allocation3], 0
    %12 = vsyncpa [#allocation6], 0
    %13 = vsyncpa [#allocation9], 0
    %14 = vsyncpa [#allocation4], 0
    // Predicated region
    $region2: #{tpu_custom_call.1} parent=1 // pred_check
      _
    $region3: #{tpu_custom_call.1} parent=1 // pred_check_branch
      %16 = sbr.rel (0) target = $region5
    $region4: #{tpu_custom_call.1} parent=1 // pred_region
      %s18 = ssub.s32 1024, 1024
      %19 = vsyncadd [#allocation3], %s18
      %s20 = sshll.u32 [#allocation2], 4
      %s21 = int_to_ptr.vmem [resolvable:$true] %s20
      %26 = dma.hbm_to_vmem [thread:$0]  %s0, 1024, %s21, [#allocation3], 64, 64, 4
    $region5: #{tpu_custom_call.1} parent=1 // pred_fallthru
      _
    // Predicated region
    $region6: #{tpu_custom_call.1} parent=1 // pred_check
      _
    $region7: #{tpu_custom_call.1} parent=1 // pred_check_branch
      %28 = sbr.rel (0) target = $region9
    $region8: #{tpu_custom_call.1} parent=1 // pred_region
      %s30 = ssub.s32 1280, 1280
      %31 = vsyncadd [#allocation6], %s30
      %s32 = sshll.u32 [#allocation5], 4
      %s33 = int_to_ptr.vmem [resolvable:$true] %s32
      %38 = dma.hbm_to_vmem [thread:$0]  %s1, 1280, %s33, [#allocation6], 64, 64, 4
    $region9: #{tpu_custom_call.1} parent=1 // pred_fallthru
      _
    // Predicated region
    $region10: #{tpu_custom_call.1} parent=1 // pred_check
      _
    $region11: #{tpu_custom_call.1} parent=1 // pred_check_branch
      %40 = sbr.rel (0) target = $region13
    $region12: #{tpu_custom_call.1} parent=1 // pred_region
      _
    $region13: #{tpu_custom_call.1} parent=1 // pred_fallthru
      _
    // Predicated region
    $region14: #{tpu_custom_call.1} parent=1 // pred_check
      _
    $region15: #{tpu_custom_call.1} parent=1 // pred_check_branch
      %42 = sbr.rel (0) target = $region17
    $region16: #{tpu_custom_call.1} parent=1 // pred_region
      %s44 = ssub.s32 256, 256
      %45 = vsyncadd [#allocation6], %s44
      %s46 = sshll.u32 [#allocation7], 4
      %s47 = int_to_ptr.vmem [resolvable:$true] %s46
      %52 = dma.hbm_to_vmem [thread:$0]  %s3, 256, %s47, [#allocation6], 128, 128, 8
    $region17: #{tpu_custom_call.1} parent=1 // pred_fallthru
      _
    // Predicated region
    $region18: #{tpu_custom_call.1} parent=1 // pred_check
      _
    $region19: #{tpu_custom_call.1} parent=1 // pred_check_branch
      %54 = sbr.rel (0) target = $region21
    $region20: #{tpu_custom_call.1} parent=1 // pred_region
      %s56 = ssub.s32 1024, 1024
      %57 = vsyncadd [#allocation9], %s56
      %s58 = sshll.u32 [#allocation8], 4
      %s59 = int_to_ptr.vmem [resolvable:$true] %s58
      %64 = dma.hbm_to_vmem [thread:$0]  %s4, 1024, %s59, [#allocation9], 64, 64, 4
    $region21: #{tpu_custom_call.1} parent=1 // pred_fallthru
      _
    // Predicated region
    $region22: #{tpu_custom_call.1} parent=1 // pred_check
      _
    $region23: #{tpu_custom_call.1} parent=1 // pred_check_branch
      %66 = sbr.rel (0) target = $region25
    $region24: #{tpu_custom_call.1} parent=1 // pred_region
      _
    $region25: #{tpu_custom_call.1} parent=1 // pred_fallthru
      _
    // Predicated region
    $region26: #{tpu_custom_call.1} parent=1 // pred_check
      _
    $region27: #{tpu_custom_call.1} parent=1 // pred_check_branch
      %68 = sbr.rel (0) target = $region29
    $region28: #{tpu_custom_call.1} parent=1 // pred_region
      %69 = dma.done [#allocation3], 1024
    $region29: #{tpu_custom_call.1} parent=1 // pred_fallthru
      _
    // Predicated region
    $region30: #{tpu_custom_call.1} parent=1 // pred_check
      _
    $region31: #{tpu_custom_call.1} parent=1 // pred_check_branch
      %71 = sbr.rel (0) target = $region33
    $region32: #{tpu_custom_call.1} parent=1 // pred_region
      %72 = dma.done [#allocation6], 1280
    $region33: #{tpu_custom_call.1} parent=1 // pred_fallthru
      _
    // Predicated region
    $region34: #{tpu_custom_call.1} parent=1 // pred_check
      _
    $region35: #{tpu_custom_call.1} parent=1 // pred_check_branch
      %74 = sbr.rel (0) target = $region37
    $region36: #{tpu_custom_call.1} parent=1 // pred_region
      %75 = dma.done [#allocation6], 256
    $region37: #{tpu_custom_call.1} parent=1 // pred_fallthru
      _
    // Predicated region
    $region38: #{tpu_custom_call.1} parent=1 // pred_check
      _
    $region39: #{tpu_custom_call.1} parent=1 // pred_check_branch
      %77 = sbr.rel (0) target = $region41
    $region40: #{tpu_custom_call.1} parent=1 // pred_region
      %78 = dma.done [#allocation9], 1024
    $region41: #{tpu_custom_call.1} parent=1 // pred_fallthru
      _
    %v80 = vld [vmem:[#allocation2] sm:$0xf]
    %v81 = vld [vmem:[#allocation2 + $0x4] sm:$0xf]
    %v82 = vld [vmem:[#allocation2 + $0x8] sm:$0xf]
    %v83 = vld [vmem:[#allocation2 + $0xc] sm:$0xf]
    %v84 = vld [vmem:[#allocation2 + $0x10] sm:$0xf]
    %v85 = vld [vmem:[#allocation2 + $0x14] sm:$0xf]
    %v86 = vld [vmem:[#allocation2 + $0x18] sm:$0xf]
    %v87 = vld [vmem:[#allocation2 + $0x1c] sm:$0xf]
    %v88 = vld [vmem:[#allocation2 + $0x20] sm:$0xf]
    %v89 = vld [vmem:[#allocation2 + $0x24] sm:$0xf]
    %v90 = vld [vmem:[#allocation2 + $0x28] sm:$0xf]
    %v91 = vld [vmem:[#allocation2 + $0x2c] sm:$0xf]
    %v92 = vld [vmem:[#allocation2 + $0x30] sm:$0xf]
    %v93 = vld [vmem:[#allocation2 + $0x34] sm:$0xf]
    %v94 = vld [vmem:[#allocation2 + $0x38] sm:$0xf]
    %v95 = vld [vmem:[#allocation2 + $0x3c] sm:$0xf]
    %v96 = vunpack.c.l.bf16 %v80
    %v97 = vunpack.c.l.bf16 %v81
    %v98 = vunpack.c.l.bf16 %v82
    %v99 = vunpack.c.l.bf16 %v83
    %v100 = vunpack.c.l.bf16 %v84
    %v101 = vunpack.c.l.bf16 %v85
    %v102 = vunpack.c.l.bf16 %v86
    %v103 = vunpack.c.l.bf16 %v87
    %v104 = vunpack.c.l.bf16 %v88
    %v105 = vunpack.c.l.bf16 %v89
    %v106 = vunpack.c.l.bf16 %v90
    %v107 = vunpack.c.l.bf16 %v91
    %v108 = vunpack.c.l.bf16 %v92
    %v109 = vunpack.c.l.bf16 %v93
    %v110 = vunpack.c.l.bf16 %v94
    %v111 = vunpack.c.l.bf16 %v95
    %v112 = vld [vmem:[#allocation5] sm:$0xf]
    %v113 = vld [vmem:[#allocation5 + $0x4] sm:$0xf]
    %v114 = vld [vmem:[#allocation5 + $0x8] sm:$0xf]
    %v115 = vld [vmem:[#allocation5 + $0xc] sm:$0xf]
    %v116 = vrot.slane %v96, 1
    %v117 = vrot.slane %v97, 1
    %v118 = vrot.slane %v98, 1
    %v119 = vrot.slane %v99, 1
    %v120 = vrot.slane %v100, 1
    %v121 = vrot.slane %v101, 1
    %v122 = vrot.slane %v102, 1
    %v123 = vrot.slane %v103, 1
    %v124 = vrot.slane %v104, 1
    %v125 = vrot.slane %v105, 1
    %v126 = vrot.slane %v106, 1
    %v127 = vrot.slane %v107, 1
    %v128 = vrot.slane %v108, 1
    %v129 = vrot.slane %v109, 1
    %v130 = vrot.slane %v110, 1
    %v131 = vrot.slane %v111, 1
    %v132 = vlaneseq
    %v133 = vshrl.u32 %v132, 7
    %vm134 = vcmp.lt.s32.totalorder %v133, 7
    %v135 = vsel %vm134, %v130, %v131
    %v136 = vsel %vm134, %v129, %v130
    %v137 = vsel %vm134, %v128, %v129
    %v138 = vsel %vm134, %v127, %v128
    %v139 = vsel %vm134, %v126, %v127
    %v140 = vsel %vm134, %v125, %v126
    %v141 = vsel %vm134, %v124, %v125
    %v142 = vsel %vm134, %v123, %v124
    %v143 = vsel %vm134, %v122, %v123
    %v144 = vsel %vm134, %v121, %v122
    %v145 = vsel %vm134, %v120, %v121
    %v146 = vsel %vm134, %v119, %v120
    %v147 = vsel %vm134, %v118, %v119
    %v148 = vsel %vm134, %v117, %v118
    %v149 = vsel %vm134, %v116, %v117
    %v150 = vsel %vm134, %v131, %v116
    %v151 = vpack.c.bf16 %v148, %v149
    %v152 = vpack.c.bf16 %v146, %v147
    %v153 = vpack.c.bf16 %v144, %v145
    %v154 = vpack.c.bf16 %v142, %v143
    %v155 = vpack.c.bf16 %v140, %v141
    %v156 = vpack.c.bf16 %v138, %v139
    %v157 = vpack.c.bf16 %v136, %v137
    %v158 = vpack.c.bf16 %v150, %v135
    %s159 = scalar_lea.vmem [#allocation5], 16
    %v160 = vld [vmem:[%s159] sm:$0xf]
    %v161 = vld [vmem:[%s159 + $0x4] sm:$0xf]
    %v162 = vld [vmem:[%s159 + $0x8] sm:$0xf]
    %v163 = vld [vmem:[%s159 + $0xc] sm:$0xf]
    %v168 = vunpack.c.l.b16 %v160
    %v169 = vunpack.c.l.b16 %v161
    %v170 = vunpack.c.l.b16 %v162
    %v171 = vunpack.c.l.b16 %v163
    %v172 = vpack.c.b16 %v169, %v168
    %v173 = vpack.c.b16 %v171, %v170
    %vm176 = vcmask 261120
    %v178 = vsel %vm176, %v151, 0
    %v181 = vsel %vm176, %v152, 0
    %v184 = vsel %vm176, %v153, 0
    %v187 = vsel %vm176, %v154, 0
    %v190 = vsel %vm176, %v155, 0
    %v193 = vsel %vm176, %v156, 0
    %v196 = vsel %vm176, %v157, 0
    %v199 = vsel %vm176, %v158, 0
    %201 = vmatprep.subr.bf16.mxu0 0
    %202 = vmatpush1.bf16.msra.mxu0 %v172
    %203 = vmatprep.subr.bf16.mxu0 0
    %204 = vmatpush1.bf16.msra.mxu0 %v173
    %205 = vmatprep.subr.bf16.mxu0 0
    %206 = vmatpush1.bf16.msra.mxu0 0
    %207 = vmatprep.subr.bf16.mxu0 0
    %208 = vmatpush1.bf16.msra.mxu0 0
    %209 = vmatprep.subr.bf16.mxu0 0
    %210 = vmatpush1.bf16.msra.mxu0 0
    %211 = vmatprep.subr.bf16.mxu0 0
    %212 = vmatpush1.bf16.msra.mxu0 0
    %213 = vmatprep.subr.bf16.mxu0 0
    %214 = vmatpush1.bf16.msra.mxu0 0
    %215 = vmatprep.subr.bf16.mxu0 0
    %216 = vmatpush1.bf16.msra.mxu0 0
    %217 = vmatprep.subr.bf16.mxu0 0
    %218 = vmatpush1.bf16.msra.mxu0 0
    %219 = vmatprep.subr.bf16.mxu0 0
    %220 = vmatpush1.bf16.msra.mxu0 0
    %221 = vmatprep.subr.bf16.mxu0 0
    %222 = vmatpush1.bf16.msra.mxu0 0
    %223 = vmatprep.subr.bf16.mxu0 0
    %224 = vmatpush1.bf16.msra.mxu0 0
    %225 = vmatprep.subr.bf16.mxu0 0
    %226 = vmatpush1.bf16.msra.mxu0 0
    %227 = vmatprep.subr.bf16.mxu0 0
    %228 = vmatpush1.bf16.msra.mxu0 0
    %229 = vmatprep.subr.bf16.mxu0 0
    %230 = vmatpush1.bf16.msra.mxu0 0
    %231 = vmatprep.subr.bf16.mxu0 0
    %232 = vmatpush1.bf16.msra.mxu0 0
    %233 = vmatprep.mubr.bf16.mxu0 0
    %234 = vmatmul.mubr.bf16.gmra.mrb[0].mxu0 %v178
    %v235 = vpop.f32.mrb[0].mxu0
    %v236 = vadd.f32 0.0, %v235
    %v237 = vpop.f32.mrb[0].mxu0
    %v238 = vpop.f32.mrb[0].mxu0
    %v239 = vadd.f32 0.0, %v238
    %v240 = vpop.f32.mrb[0].mxu0
    %241 = vmatprep.mubr.bf16.mxu0 0
    %242 = vmatmul.mubr.bf16.gmra.mrb[0].mxu0 %v181
    %v243 = vpop.f32.mrb[0].mxu0
    %v244 = vadd.f32 0.0, %v243
    %v245 = vpop.f32.mrb[0].mxu0
    %v246 = vpop.f32.mrb[0].mxu0
    %v247 = vadd.f32 0.0, %v246
    %v248 = vpop.f32.mrb[0].mxu0
    %249 = vmatprep.mubr.bf16.mxu0 0
    %250 = vmatmul.mubr.bf16.gmra.mrb[0].mxu0 %v184
    %v251 = vpop.f32.mrb[0].mxu0
    %v252 = vadd.f32 0.0, %v251
    %v253 = vpop.f32.mrb[0].mxu0
    %v254 = vpop.f32.mrb[0].mxu0
    %v255 = vadd.f32 0.0, %v254
    %v256 = vpop.f32.mrb[0].mxu0
    %257 = vmatprep.mubr.bf16.mxu0 0
    %258 = vmatmul.mubr.bf16.gmra.mrb[0].mxu0 %v187
    %v259 = vpop.f32.mrb[0].mxu0
    %v260 = vadd.f32 0.0, %v259
    %v261 = vpop.f32.mrb[0].mxu0
    %v262 = vpop.f32.mrb[0].mxu0
    %v263 = vadd.f32 0.0, %v262
    %v264 = vpop.f32.mrb[0].mxu0
    %265 = vmatprep.mubr.bf16.mxu0 0
    %266 = vmatmul.mubr.bf16.gmra.mrb[0].mxu0 %v190
    %v267 = vpop.f32.mrb[0].mxu0
    %v268 = vadd.f32 0.0, %v267
    %v269 = vpop.f32.mrb[0].mxu0
    %v270 = vpop.f32.mrb[0].mxu0
    %v271 = vadd.f32 0.0, %v270
    %v272 = vpop.f32.mrb[0].mxu0
    %273 = vmatprep.mubr.bf16.mxu0 0
    %274 = vmatmul.mubr.bf16.gmra.mrb[0].mxu0 %v193
    %v275 = vpop.f32.mrb[0].mxu0
    %v276 = vadd.f32 0.0, %v275
    %v277 = vpop.f32.mrb[0].mxu0
    %v278 = vpop.f32.mrb[0].mxu0
    %v279 = vadd.f32 0.0, %v278
    %v280 = vpop.f32.mrb[0].mxu0
    %281 = vmatprep.mubr.bf16.mxu0 0
    %282 = vmatmul.mubr.bf16.gmra.mrb[0].mxu0 %v196
    %v283 = vpop.f32.mrb[0].mxu0
    %v284 = vadd.f32 0.0, %v283
    %v285 = vpop.f32.mrb[0].mxu0
    %v286 = vpop.f32.mrb[0].mxu0
    %v287 = vadd.f32 0.0, %v286
    %v288 = vpop.f32.mrb[0].mxu0
    %289 = vmatprep.mubr.bf16.mxu0 0
    %290 = vmatmul.mubr.bf16.gmra.mrb[0].mxu0 %v199
    %v291 = vpop.f32.mrb[0].mxu0
    %v292 = vadd.f32 0.0, %v291
    %v293 = vpop.f32.mrb[0].mxu0
    %v294 = vpop.f32.mrb[0].mxu0
    %v295 = vadd.f32 0.0, %v294
    %v296 = vpop.f32.mrb[0].mxu0
    %297 = vdwg.mxu0
    %v314 = vunpack.c.l.b16 %v80
    %v315 = vunpack.c.l.b16 %v81
    %v316 = vunpack.c.l.b16 %v82
    %v317 = vunpack.c.l.b16 %v83
    %v318 = vunpack.c.l.b16 %v84
    %v319 = vunpack.c.l.b16 %v85
    %v320 = vunpack.c.l.b16 %v86
    %v321 = vunpack.c.l.b16 %v87
    %v322 = vunpack.c.l.b16 %v88
    %v323 = vunpack.c.l.b16 %v89
    %v324 = vunpack.c.l.b16 %v90
    %v325 = vunpack.c.l.b16 %v91
    %v326 = vunpack.c.l.b16 %v92
    %v327 = vunpack.c.l.b16 %v93
    %v328 = vunpack.c.l.b16 %v94
    %v329 = vunpack.c.l.b16 %v95
    %v330 = vpack.c.b16 %v315, %v314
    %v331 = vpack.c.b16 %v317, %v316
    %v332 = vpack.c.b16 %v319, %v318
    %v333 = vpack.c.b16 %v321, %v320
    %v334 = vpack.c.b16 %v323, %v322
    %v335 = vpack.c.b16 %v325, %v324
    %v336 = vpack.c.b16 %v327, %v326
    %v337 = vpack.c.b16 %v329, %v328
    %v342 = vunpack.c.l.b16 %v112
    %v343 = vunpack.c.l.b16 %v113
    %v344 = vunpack.c.l.b16 %v114
    %v345 = vunpack.c.l.b16 %v115
    %v346 = vpack.c.b16 %v343, %v342
    %v347 = vpack.c.b16 %v345, %v344
    %v351 = vsel %vm176, %v330, 0
    %v354 = vsel %vm176, %v331, 0
    %v357 = vsel %vm176, %v332, 0
    %v360 = vsel %vm176, %v333, 0
    %v363 = vsel %vm176, %v334, 0
    %v366 = vsel %vm176, %v335, 0
    %v369 = vsel %vm176, %v336, 0
    %v372 = vsel %vm176, %v337, 0
    %374 = vmatprep.subr.bf16.mxu0 0
    %375 = vmatpush1.bf16.msra.mxu0 %v346
    %376 = vmatprep.subr.bf16.mxu0 0
    %377 = vmatpush1.bf16.msra.mxu0 %v347
    %378 = vmatprep.subr.bf16.mxu0 0
    %379 = vmatpush1.bf16.msra.mxu0 0
    %380 = vmatprep.subr.bf16.mxu0 0
    %381 = vmatpush1.bf16.msra.mxu0 0
    %382 = vmatprep.subr.bf16.mxu0 0
    %383 = vmatpush1.bf16.msra.mxu0 0
    %384 = vmatprep.subr.bf16.mxu0 0
    %385 = vmatpush1.bf16.msra.mxu0 0
    %386 = vmatprep.subr.bf16.mxu0 0
    %387 = vmatpush1.bf16.msra.mxu0 0
    %388 = vmatprep.subr.bf16.mxu0 0
    %389 = vmatpush1.bf16.msra.mxu0 0
    %390 = vmatprep.subr.bf16.mxu0 0
    %391 = vmatpush1.bf16.msra.mxu0 0
    %392 = vmatprep.subr.bf16.mxu0 0
    %393 = vmatpush1.bf16.msra.mxu0 0
    %394 = vmatprep.subr.bf16.mxu0 0
    %395 = vmatpush1.bf16.msra.mxu0 0
    %396 = vmatprep.subr.bf16.mxu0 0
    %397 = vmatpush1.bf16.msra.mxu0 0
    %398 = vmatprep.subr.bf16.mxu0 0
    %399 = vmatpush1.bf16.msra.mxu0 0
    %400 = vmatprep.subr.bf16.mxu0 0
    %401 = vmatpush1.bf16.msra.mxu0 0
    %402 = vmatprep.subr.bf16.mxu0 0
    %403 = vmatpush1.bf16.msra.mxu0 0
    %404 = vmatprep.subr.bf16.mxu0 0
    %405 = vmatpush1.bf16.msra.mxu0 0
    %406 = vmatprep.mubr.bf16.mxu0 0
    %407 = vmatmul.mubr.bf16.gmra.mrb[0].mxu0 %v351
    %v408 = vpop.f32.mrb[0].mxu0
    %v409 = vadd.f32 %v236, %v408
    %v410 = vpop.f32.mrb[0].mxu0
    %v411 = vpop.f32.mrb[0].mxu0
    %v412 = vadd.f32 %v239, %v411
    %v413 = vpop.f32.mrb[0].mxu0
    %414 = vmatprep.mubr.bf16.mxu0 0
    %415 = vmatmul.mubr.bf16.gmra.mrb[0].mxu0 %v354
    %v416 = vpop.f32.mrb[0].mxu0
    %v417 = vadd.f32 %v244, %v416
    %v418 = vpop.f32.mrb[0].mxu0
    %v419 = vpop.f32.mrb[0].mxu0
    %v420 = vadd.f32 %v247, %v419
    %v421 = vpop.f32.mrb[0].mxu0
    %422 = vmatprep.mubr.bf16.mxu0 0
    %423 = vmatmul.mubr.bf16.gmra.mrb[0].mxu0 %v357
    %v424 = vpop.f32.mrb[0].mxu0
    %v425 = vadd.f32 %v252, %v424
    %v426 = vpop.f32.mrb[0].mxu0
    %v427 = vpop.f32.mrb[0].mxu0
    %v428 = vadd.f32 %v255, %v427
    %v429 = vpop.f32.mrb[0].mxu0
    %430 = vmatprep.mubr.bf16.mxu0 0
    %431 = vmatmul.mubr.bf16.gmra.mrb[0].mxu0 %v360
    %v432 = vpop.f32.mrb[0].mxu0
    %v433 = vadd.f32 %v260, %v432
    %v434 = vpop.f32.mrb[0].mxu0
    %v435 = vpop.f32.mrb[0].mxu0
    %v436 = vadd.f32 %v263, %v435
    %v437 = vpop.f32.mrb[0].mxu0
    %438 = vmatprep.mubr.bf16.mxu0 0
    %439 = vmatmul.mubr.bf16.gmra.mrb[0].mxu0 %v363
    %v440 = vpop.f32.mrb[0].mxu0
    %v441 = vadd.f32 %v268, %v440
    %v442 = vpop.f32.mrb[0].mxu0
    %v443 = vpop.f32.mrb[0].mxu0
    %v444 = vadd.f32 %v271, %v443
    %v445 = vpop.f32.mrb[0].mxu0
    %446 = vmatprep.mubr.bf16.mxu0 0
    %447 = vmatmul.mubr.bf16.gmra.mrb[0].mxu0 %v366
    %v448 = vpop.f32.mrb[0].mxu0
    %v449 = vadd.f32 %v276, %v448
    %v450 = vpop.f32.mrb[0].mxu0
    %v451 = vpop.f32.mrb[0].mxu0
    %v452 = vadd.f32 %v279, %v451
    %v453 = vpop.f32.mrb[0].mxu0
    %454 = vmatprep.mubr.bf16.mxu0 0
    %455 = vmatmul.mubr.bf16.gmra.mrb[0].mxu0 %v369
    %v456 = vpop.f32.mrb[0].mxu0
    %v457 = vadd.f32 %v284, %v456
    %v458 = vpop.f32.mrb[0].mxu0
    %v459 = vpop.f32.mrb[0].mxu0
    %v460 = vadd.f32 %v287, %v459
    %v461 = vpop.f32.mrb[0].mxu0
    %462 = vmatprep.mubr.bf16.mxu0 0
    %463 = vmatmul.mubr.bf16.gmra.mrb[0].mxu0 %v372
    %v464 = vpop.f32.mrb[0].mxu0
    %v465 = vadd.f32 %v292, %v464
    %v466 = vpop.f32.mrb[0].mxu0
    %v467 = vpop.f32.mrb[0].mxu0
    %v468 = vadd.f32 %v295, %v467
    %v469 = vpop.f32.mrb[0].mxu0
    %470 = vdwg.mxu0
    %v471 = vrot.slane %v96, 2
    %v472 = vrot.slane %v97, 2
    %v473 = vrot.slane %v98, 2
    %v474 = vrot.slane %v99, 2
    %v475 = vrot.slane %v100, 2
    %v476 = vrot.slane %v101, 2
    %v477 = vrot.slane %v102, 2
    %v478 = vrot.slane %v103, 2
    %v479 = vrot.slane %v104, 2
    %v480 = vrot.slane %v105, 2
    %v481 = vrot.slane %v106, 2
    %v482 = vrot.slane %v107, 2
    %v483 = vrot.slane %v108, 2
    %v484 = vrot.slane %v109, 2
    %v485 = vrot.slane %v110, 2
    %v486 = vrot.slane %v111, 2
    %vm487 = vcmp.lt.s32.totalorder %v133, 6
    %v488 = vsel %vm487, %v485, %v486
    %v489 = vsel %vm487, %v484, %v485
    %v490 = vsel %vm487, %v483, %v484
    %v491 = vsel %vm487, %v482, %v483
    %v492 = vsel %vm487, %v481, %v482
    %v493 = vsel %vm487, %v480, %v481
    %v494 = vsel %vm487, %v479, %v480
    %v495 = vsel %vm487, %v478, %v479
    %v496 = vsel %vm487, %v477, %v478
    %v497 = vsel %vm487, %v476, %v477
    %v498 = vsel %vm487, %v475, %v476
    %v499 = vsel %vm487, %v474, %v475
    %v500 = vsel %vm487, %v473, %v474
    %v501 = vsel %vm487, %v472, %v473
    %v502 = vsel %vm487, %v471, %v472
    %v503 = vsel %vm487, %v486, %v471
    %v504 = vpack.c.bf16 %v501, %v502
    %v505 = vpack.c.bf16 %v499, %v500
    %v506 = vpack.c.bf16 %v497, %v498
    %v507 = vpack.c.bf16 %v495, %v496
    %v508 = vpack.c.bf16 %v493, %v494
    %v509 = vpack.c.bf16 %v491, %v492
    %v510 = vpack.c.bf16 %v489, %v490
    %v511 = vpack.c.bf16 %v503, %v488
    %s512 = scalar_lea.vmem [#allocation5], 32
    %v513 = vld [vmem:[%s512] sm:$0xf]
    %v514 = vld [vmem:[%s512 + $0x4] sm:$0xf]
    %v515 = vld [vmem:[%s512 + $0x8] sm:$0xf]
    %v516 = vld [vmem:[%s512 + $0xc] sm:$0xf]
    %v521 = vunpack.c.l.b16 %v513
    %v522 = vunpack.c.l.b16 %v514
    %v523 = vunpack.c.l.b16 %v515
    %v524 = vunpack.c.l.b16 %v516
    %v525 = vpack.c.b16 %v522, %v521
    %v526 = vpack.c.b16 %v524, %v523
    %v530 = vsel %vm176, %v504, 0
    %v533 = vsel %vm176, %v505, 0
    %v536 = vsel %vm176, %v506, 0
    %v539 = vsel %vm176, %v507, 0
    %v542 = vsel %vm176, %v508, 0
    %v545 = vsel %vm176, %v509, 0
    %v548 = vsel %vm176, %v510, 0
    %v551 = vsel %vm176, %v511, 0
    %553 = vmatprep.subr.bf16.mxu0 0
    %554 = vmatpush1.bf16.msra.mxu0 %v525
    %555 = vmatprep.subr.bf16.mxu0 0
    %556 = vmatpush1.bf16.msra.mxu0 %v526
    %557 = vmatprep.subr.bf16.mxu0 0
    %558 = vmatpush1.bf16.msra.mxu0 0
    %559 = vmatprep.subr.bf16.mxu0 0
    %560 = vmatpush1.bf16.msra.mxu0 0
    %561 = vmatprep.subr.bf16.mxu0 0
    %562 = vmatpush1.bf16.msra.mxu0 0
    %563 = vmatprep.subr.bf16.mxu0 0
    %564 = vmatpush1.bf16.msra.mxu0 0
    %565 = vmatprep.subr.bf16.mxu0 0
    %566 = vmatpush1.bf16.msra.mxu0 0
    %567 = vmatprep.subr.bf16.mxu0 0
    %568 = vmatpush1.bf16.msra.mxu0 0
    %569 = vmatprep.subr.bf16.mxu0 0
    %570 = vmatpush1.bf16.msra.mxu0 0
    %571 = vmatprep.subr.bf16.mxu0 0
    %572 = vmatpush1.bf16.msra.mxu0 0
    %573 = vmatprep.subr.bf16.mxu0 0
    %574 = vmatpush1.bf16.msra.mxu0 0
    %575 = vmatprep.subr.bf16.mxu0 0
    %576 = vmatpush1.bf16.msra.mxu0 0
    %577 = vmatprep.subr.bf16.mxu0 0
    %578 = vmatpush1.bf16.msra.mxu0 0
    %579 = vmatprep.subr.bf16.mxu0 0
    %580 = vmatpush1.bf16.msra.mxu0 0
    %581 = vmatprep.subr.bf16.mxu0 0
    %582 = vmatpush1.bf16.msra.mxu0 0
    %583 = vmatprep.subr.bf16.mxu0 0
    %584 = vmatpush1.bf16.msra.mxu0 0
    %585 = vmatprep.mubr.bf16.mxu0 0
    %586 = vmatmul.mubr.bf16.gmra.mrb[0].mxu0 %v530
    %v587 = vpop.f32.mrb[0].mxu0
    %v588 = vadd.f32 0.0, %v587
    %v589 = vpop.f32.mrb[0].mxu0
    %v590 = vpop.f32.mrb[0].mxu0
    %v591 = vadd.f32 0.0, %v590
    %v592 = vpop.f32.mrb[0].mxu0
    %593 = vmatprep.mubr.bf16.mxu0 0
    %594 = vmatmul.mubr.bf16.gmra.mrb[0].mxu0 %v533
    %v595 = vpop.f32.mrb[0].mxu0
    %v596 = vadd.f32 0.0, %v595
    %v597 = vpop.f32.mrb[0].mxu0
    %v598 = vpop.f32.mrb[0].mxu0
    %v599 = vadd.f32 0.0, %v598
    %v600 = vpop.f32.mrb[0].mxu0
    %601 = vmatprep.mubr.bf16.mxu0 0
    %602 = vmatmul.mubr.bf16.gmra.mrb[0].mxu0 %v536
    %v603 = vpop.f32.mrb[0].mxu0
    %v604 = vadd.f32 0.0, %v603
    %v605 = vpop.f32.mrb[0].mxu0
    %v606 = vpop.f32.mrb[0].mxu0
    %v607 = vadd.f32 0.0, %v606
    %v608 = vpop.f32.mrb[0].mxu0
    %609 = vmatprep.mubr.bf16.mxu0 0
    %610 = vmatmul.mubr.bf16.gmra.mrb[0].mxu0 %v539
    %v611 = vpop.f32.mrb[0].mxu0
    %v612 = vadd.f32 0.0, %v611
    %v613 = vpop.f32.mrb[0].mxu0
    %v614 = vpop.f32.mrb[0].mxu0
    %v615 = vadd.f32 0.0, %v614
    %v616 = vpop.f32.mrb[0].mxu0
    %617 = vmatprep.mubr.bf16.mxu0 0
    %618 = vmatmul.mubr.bf16.gmra.mrb[0].mxu0 %v542
    %v619 = vpop.f32.mrb[0].mxu0
    %v620 = vadd.f32 0.0, %v619
    %v621 = vpop.f32.mrb[0].mxu0
    %v622 = vpop.f32.mrb[0].mxu0
    %v623 = vadd.f32 0.0, %v622
    %v624 = vpop.f32.mrb[0].mxu0
    %625 = vmatprep.mubr.bf16.mxu0 0
    %626 = vmatmul.mubr.bf16.gmra.mrb[0].mxu0 %v545
    %v627 = vpop.f32.mrb[0].mxu0
    %v628 = vadd.f32 0.0, %v627
    %v629 = vpop.f32.mrb[0].mxu0
    %v630 = vpop.f32.mrb[0].mxu0
    %v631 = vadd.f32 0.0, %v630
    %v632 = vpop.f32.mrb[0].mxu0
    %633 = vmatprep.mubr.bf16.mxu0 0
    %634 = vmatmul.mubr.bf16.gmra.mrb[0].mxu0 %v548
    %v635 = vpop.f32.mrb[0].mxu0
    %v636 = vadd.f32 0.0, %v635
    %v637 = vpop.f32.mrb[0].mxu0
    %v638 = vpop.f32.mrb[0].mxu0
    %v639 = vadd.f32 0.0, %v638
    %v640 = vpop.f32.mrb[0].mxu0
    %641 = vmatprep.mubr.bf16.mxu0 0
    %642 = vmatmul.mubr.bf16.gmra.mrb[0].mxu0 %v551
    %v643 = vpop.f32.mrb[0].mxu0
    %v644 = vadd.f32 0.0, %v643
    %v645 = vpop.f32.mrb[0].mxu0
    %v646 = vpop.f32.mrb[0].mxu0
    %v647 = vadd.f32 0.0, %v646
    %v648 = vpop.f32.mrb[0].mxu0
    %649 = vdwg.mxu0
    %v650 = vadd.f32 %v409, %v588
    %v651 = vadd.f32 %v412, %v591
    %v652 = vadd.f32 %v417, %v596
    %v653 = vadd.f32 %v420, %v599
    %v654 = vadd.f32 %v425, %v604
    %v655 = vadd.f32 %v428, %v607
    %v656 = vadd.f32 %v433, %v612
    %v657 = vadd.f32 %v436, %v615
    %v658 = vadd.f32 %v441, %v620
    %v659 = vadd.f32 %v444, %v623
    %v660 = vadd.f32 %v449, %v628
    %v661 = vadd.f32 %v452, %v631
    %v662 = vadd.f32 %v457, %v636
    %v663 = vadd.f32 %v460, %v639
    %v664 = vadd.f32 %v465, %v644
    %v665 = vadd.f32 %v468, %v647
    %v666 = vrot.slane %v96, 3
    %v667 = vrot.slane %v97, 3
    %v668 = vrot.slane %v98, 3
    %v669 = vrot.slane %v99, 3
    %v670 = vrot.slane %v100, 3
    %v671 = vrot.slane %v101, 3
    %v672 = vrot.slane %v102, 3
    %v673 = vrot.slane %v103, 3
    %v674 = vrot.slane %v104, 3
    %v675 = vrot.slane %v105, 3
    %v676 = vrot.slane %v106, 3
    %v677 = vrot.slane %v107, 3
    %v678 = vrot.slane %v108, 3
    %v679 = vrot.slane %v109, 3
    %v680 = vrot.slane %v110, 3
    %v681 = vrot.slane %v111, 3
    %vm682 = vcmp.lt.s32.totalorder %v133, 5
    %v683 = vsel %vm682, %v680, %v681
    %v684 = vsel %vm682, %v679, %v680
    %v685 = vsel %vm682, %v678, %v679
    %v686 = vsel %vm682, %v677, %v678
    %v687 = vsel %vm682, %v676, %v677
    %v688 = vsel %vm682, %v675, %v676
    %v689 = vsel %vm682, %v674, %v675
    %v690 = vsel %vm682, %v673, %v674
    %v691 = vsel %vm682, %v672, %v673
    %v692 = vsel %vm682, %v671, %v672
    %v693 = vsel %vm682, %v670, %v671
    %v694 = vsel %vm682, %v669, %v670
    %v695 = vsel %vm682, %v668, %v669
    %v696 = vsel %vm682, %v667, %v668
    %v697 = vsel %vm682, %v666, %v667
    %v698 = vsel %vm682, %v681, %v666
    %v699 = vpack.c.bf16 %v696, %v697
    %v700 = vpack.c.bf16 %v694, %v695
    %v701 = vpack.c.bf16 %v692, %v693
    %v702 = vpack.c.bf16 %v690, %v691
    %v703 = vpack.c.bf16 %v688, %v689
    %v704 = vpack.c.bf16 %v686, %v687
    %v705 = vpack.c.bf16 %v684, %v685
    %v706 = vpack.c.bf16 %v698, %v683
    %s707 = scalar_lea.vmem [#allocation5], 48
    %v708 = vld [vmem:[%s707] sm:$0xf]
    %v709 = vld [vmem:[%s707 + $0x4] sm:$0xf]
    %v710 = vld [vmem:[%s707 + $0x8] sm:$0xf]
    %v711 = vld [vmem:[%s707 + $0xc] sm:$0xf]
    %v716 = vunpack.c.l.b16 %v708
    %v717 = vunpack.c.l.b16 %v709
    %v718 = vunpack.c.l.b16 %v710
    %v719 = vunpack.c.l.b16 %v711
    %v720 = vpack.c.b16 %v717, %v716
    %v721 = vpack.c.b16 %v719, %v718
    %v725 = vsel %vm176, %v699, 0
    %v728 = vsel %vm176, %v700, 0
    %v731 = vsel %vm176, %v701, 0
    %v734 = vsel %vm176, %v702, 0
    %v737 = vsel %vm176, %v703, 0
    %v740 = vsel %vm176, %v704, 0
    %v743 = vsel %vm176, %v705, 0
    %v746 = vsel %vm176, %v706, 0
    %748 = vmatprep.subr.bf16.mxu0 0
    %749 = vmatpush1.bf16.msra.mxu0 %v720
    %750 = vmatprep.subr.bf16.mxu0 0
    %751 = vmatpush1.bf16.msra.mxu0 %v721
    %752 = vmatprep.subr.bf16.mxu0 0
    %753 = vmatpush1.bf16.msra.mxu0 0
    %754 = vmatprep.subr.bf16.mxu0 0
    %755 = vmatpush1.bf16.msra.mxu0 0
    %756 = vmatprep.subr.bf16.mxu0 0
    %757 = vmatpush1.bf16.msra.mxu0 0
    %758 = vmatprep.subr.bf16.mxu0 0
    %759 = vmatpush1.bf16.msra.mxu0 0
    %760 = vmatprep.subr.bf16.mxu0 0
    %761 = vmatpush1.bf16.msra.mxu0 0
    %762 = vmatprep.subr.bf16.mxu0 0
    %763 = vmatpush1.bf16.msra.mxu0 0
    %764 = vmatprep.subr.bf16.mxu0 0
    %765 = vmatpush1.bf16.msra.mxu0 0
    %766 = vmatprep.subr.bf16.mxu0 0
    %767 = vmatpush1.bf16.msra.mxu0 0
    %768 = vmatprep.subr.bf16.mxu0 0
    %769 = vmatpush1.bf16.msra.mxu0 0
    %770 = vmatprep.subr.bf16.mxu0 0
    %771 = vmatpush1.bf16.msra.mxu0 0
    %772 = vmatprep.subr.bf16.mxu0 0
    %773 = vmatpush1.bf16.msra.mxu0 0
    %774 = vmatprep.subr.bf16.mxu0 0
    %775 = vmatpush1.bf16.msra.mxu0 0
    %776 = vmatprep.subr.bf16.mxu0 0
    %777 = vmatpush1.bf16.msra.mxu0 0
    %778 = vmatprep.subr.bf16.mxu0 0
    %779 = vmatpush1.bf16.msra.mxu0 0
    %780 = vmatprep.mubr.bf16.mxu0 0
    %781 = vmatmul.mubr.bf16.gmra.mrb[0].mxu0 %v725
    %v782 = vpop.f32.mrb[0].mxu0
    %v783 = vadd.f32 0.0, %v782
    %v784 = vpop.f32.mrb[0].mxu0
    %v785 = vpop.f32.mrb[0].mxu0
    %v786 = vadd.f32 0.0, %v785
    %v787 = vpop.f32.mrb[0].mxu0
    %788 = vmatprep.mubr.bf16.mxu0 0
    %789 = vmatmul.mubr.bf16.gmra.mrb[0].mxu0 %v728
    %v790 = vpop.f32.mrb[0].mxu0
    %v791 = vadd.f32 0.0, %v790
    %v792 = vpop.f32.mrb[0].mxu0
    %v793 = vpop.f32.mrb[0].mxu0
    %v794 = vadd.f32 0.0, %v793
    %v795 = vpop.f32.mrb[0].mxu0
    %796 = vmatprep.mubr.bf16.mxu0 0
    %797 = vmatmul.mubr.bf16.gmra.mrb[0].mxu0 %v731
    %v798 = vpop.f32.mrb[0].mxu0
    %v799 = vadd.f32 0.0, %v798
    %v800 = vpop.f32.mrb[0].mxu0
    %v801 = vpop.f32.mrb[0].mxu0
    %v802 = vadd.f32 0.0, %v801
    %v803 = vpop.f32.mrb[0].mxu0
    %804 = vmatprep.mubr.bf16.mxu0 0
    %805 = vmatmul.mubr.bf16.gmra.mrb[0].mxu0 %v734
    %v806 = vpop.f32.mrb[0].mxu0
    %v807 = vadd.f32 0.0, %v806
    %v808 = vpop.f32.mrb[0].mxu0
    %v809 = vpop.f32.mrb[0].mxu0
    %v810 = vadd.f32 0.0, %v809
    %v811 = vpop.f32.mrb[0].mxu0
    %812 = vmatprep.mubr.bf16.mxu0 0
    %813 = vmatmul.mubr.bf16.gmra.mrb[0].mxu0 %v737
    %v814 = vpop.f32.mrb[0].mxu0
    %v815 = vadd.f32 0.0, %v814
    %v816 = vpop.f32.mrb[0].mxu0
    %v817 = vpop.f32.mrb[0].mxu0
    %v818 = vadd.f32 0.0, %v817
    %v819 = vpop.f32.mrb[0].mxu0
    %820 = vmatprep.mubr.bf16.mxu0 0
    %821 = vmatmul.mubr.bf16.gmra.mrb[0].mxu0 %v740
    %v822 = vpop.f32.mrb[0].mxu0
    %v823 = vadd.f32 0.0, %v822
    %v824 = vpop.f32.mrb[0].mxu0
    %v825 = vpop.f32.mrb[0].mxu0
    %v826 = vadd.f32 0.0, %v825
    %v827 = vpop.f32.mrb[0].mxu0
    %828 = vmatprep.mubr.bf16.mxu0 0
    %829 = vmatmul.mubr.bf16.gmra.mrb[0].mxu0 %v743
    %v830 = vpop.f32.mrb[0].mxu0
    %v831 = vadd.f32 0.0, %v830
    %v832 = vpop.f32.mrb[0].mxu0
    %v833 = vpop.f32.mrb[0].mxu0
    %v834 = vadd.f32 0.0, %v833
    %v835 = vpop.f32.mrb[0].mxu0
    %836 = vmatprep.mubr.bf16.mxu0 0
    %837 = vmatmul.mubr.bf16.gmra.mrb[0].mxu0 %v746
    %v838 = vpop.f32.mrb[0].mxu0
    %v839 = vadd.f32 0.0, %v838
    %v840 = vpop.f32.mrb[0].mxu0
    %v841 = vpop.f32.mrb[0].mxu0
    %v842 = vadd.f32 0.0, %v841
    %v843 = vpop.f32.mrb[0].mxu0
    %844 = vdwg.mxu0
    %v845 = vadd.f32 %v650, %v783
    %v846 = vadd.f32 %v651, %v786
    %v847 = vadd.f32 %v652, %v791
    %v848 = vadd.f32 %v653, %v794
    %v849 = vadd.f32 %v654, %v799
    %v850 = vadd.f32 %v655, %v802
    %v851 = vadd.f32 %v656, %v807
    %v852 = vadd.f32 %v657, %v810
    %v853 = vadd.f32 %v658, %v815
    %v854 = vadd.f32 %v659, %v818
    %v855 = vadd.f32 %v660, %v823
    %v856 = vadd.f32 %v661, %v826
    %v857 = vadd.f32 %v662, %v831
    %v858 = vadd.f32 %v663, %v834
    %v859 = vadd.f32 %v664, %v839
    %v860 = vadd.f32 %v665, %v842
    %v861 = vrot.slane %v96, 4
    %v862 = vrot.slane %v97, 4
    %v863 = vrot.slane %v98, 4
    %v864 = vrot.slane %v99, 4
    %v865 = vrot.slane %v100, 4
    %v866 = vrot.slane %v101, 4
    %v867 = vrot.slane %v102, 4
    %v868 = vrot.slane %v103, 4
    %v869 = vrot.slane %v104, 4
    %v870 = vrot.slane %v105, 4
    %v871 = vrot.slane %v106, 4
    %v872 = vrot.slane %v107, 4
    %v873 = vrot.slane %v108, 4
    %v874 = vrot.slane %v109, 4
    %v875 = vrot.slane %v110, 4
    %v876 = vrot.slane %v111, 4
    %vm877 = vcmp.lt.s32.totalorder %v133, 4
    %v878 = vsel %vm877, %v875, %v876
    %v879 = vsel %vm877, %v874, %v875
    %v880 = vsel %vm877, %v873, %v874
    %v881 = vsel %vm877, %v872, %v873
    %v882 = vsel %vm877, %v871, %v872
    %v883 = vsel %vm877, %v870, %v871
    %v884 = vsel %vm877, %v869, %v870
    %v885 = vsel %vm877, %v868, %v869
    %v886 = vsel %vm877, %v867, %v868
    %v887 = vsel %vm877, %v866, %v867
    %v888 = vsel %vm877, %v865, %v866
    %v889 = vsel %vm877, %v864, %v865
    %v890 = vsel %vm877, %v863, %v864
    %v891 = vsel %vm877, %v862, %v863
    %v892 = vsel %vm877, %v861, %v862
    %v893 = vsel %vm877, %v876, %v861
    %v894 = vpack.c.bf16 %v891, %v892
    %v895 = vpack.c.bf16 %v889, %v890
    %v896 = vpack.c.bf16 %v887, %v888
    %v897 = vpack.c.bf16 %v885, %v886
    %v898 = vpack.c.bf16 %v883, %v884
    %v899 = vpack.c.bf16 %v881, %v882
    %v900 = vpack.c.bf16 %v879, %v880
    %v901 = vpack.c.bf16 %v893, %v878
    %s902 = scalar_lea.vmem [#allocation5], 64
    %v903 = vld [vmem:[%s902] sm:$0xf]
    %v904 = vld [vmem:[%s902 + $0x4] sm:$0xf]
    %v905 = vld [vmem:[%s902 + $0x8] sm:$0xf]
    %v906 = vld [vmem:[%s902 + $0xc] sm:$0xf]
    %v911 = vunpack.c.l.b16 %v903
    %v912 = vunpack.c.l.b16 %v904
    %v913 = vunpack.c.l.b16 %v905
    %v914 = vunpack.c.l.b16 %v906
    %v915 = vpack.c.b16 %v912, %v911
    %v916 = vpack.c.b16 %v914, %v913
    %v920 = vsel %vm176, %v894, 0
    %v923 = vsel %vm176, %v895, 0
    %v926 = vsel %vm176, %v896, 0
    %v929 = vsel %vm176, %v897, 0
    %v932 = vsel %vm176, %v898, 0
    %v935 = vsel %vm176, %v899, 0
    %v938 = vsel %vm176, %v900, 0
    %v941 = vsel %vm176, %v901, 0
    %943 = vmatprep.subr.bf16.mxu0 0
    %944 = vmatpush1.bf16.msra.mxu0 %v915
    %945 = vmatprep.subr.bf16.mxu0 0
    %946 = vmatpush1.bf16.msra.mxu0 %v916
    %947 = vmatprep.subr.bf16.mxu0 0
    %948 = vmatpush1.bf16.msra.mxu0 0
    %949 = vmatprep.subr.bf16.mxu0 0
    %950 = vmatpush1.bf16.msra.mxu0 0
    %951 = vmatprep.subr.bf16.mxu0 0
    %952 = vmatpush1.bf16.msra.mxu0 0
    %953 = vmatprep.subr.bf16.mxu0 0
    %954 = vmatpush1.bf16.msra.mxu0 0
    %955 = vmatprep.subr.bf16.mxu0 0
    %956 = vmatpush1.bf16.msra.mxu0 0
    %957 = vmatprep.subr.bf16.mxu0 0
    %958 = vmatpush1.bf16.msra.mxu0 0
    %959 = vmatprep.subr.bf16.mxu0 0
    %960 = vmatpush1.bf16.msra.mxu0 0
    %961 = vmatprep.subr.bf16.mxu0 0
    %962 = vmatpush1.bf16.msra.mxu0 0
    %963 = vmatprep.subr.bf16.mxu0 0
    %964 = vmatpush1.bf16.msra.mxu0 0
    %965 = vmatprep.subr.bf16.mxu0 0
    %966 = vmatpush1.bf16.msra.mxu0 0
    %967 = vmatprep.subr.bf16.mxu0 0
    %968 = vmatpush1.bf16.msra.mxu0 0
    %969 = vmatprep.subr.bf16.mxu0 0
    %970 = vmatpush1.bf16.msra.mxu0 0
    %971 = vmatprep.subr.bf16.mxu0 0
    %972 = vmatpush1.bf16.msra.mxu0 0
    %973 = vmatprep.subr.bf16.mxu0 0
    %974 = vmatpush1.bf16.msra.mxu0 0
    %975 = vmatprep.mubr.bf16.mxu0 0
    %976 = vmatmul.mubr.bf16.gmra.mrb[0].mxu0 %v920
    %v977 = vpop.f32.mrb[0].mxu0
    %v978 = vadd.f32 0.0, %v977
    %v979 = vpop.f32.mrb[0].mxu0
    %v980 = vpop.f32.mrb[0].mxu0
    %v981 = vadd.f32 0.0, %v980
    %v982 = vpop.f32.mrb[0].mxu0
    %983 = vmatprep.mubr.bf16.mxu0 0
    %984 = vmatmul.mubr.bf16.gmra.mrb[0].mxu0 %v923
    %v985 = vpop.f32.mrb[0].mxu0
    %v986 = vadd.f32 0.0, %v985
    %v987 = vpop.f32.mrb[0].mxu0
    %v988 = vpop.f32.mrb[0].mxu0
    %v989 = vadd.f32 0.0, %v988
    %v990 = vpop.f32.mrb[0].mxu0
    %991 = vmatprep.mubr.bf16.mxu0 0
    %992 = vmatmul.mubr.bf16.gmra.mrb[0].mxu0 %v926
    %v993 = vpop.f32.mrb[0].mxu0
    %v994 = vadd.f32 0.0, %v993
    %v995 = vpop.f32.mrb[0].mxu0
    %v996 = vpop.f32.mrb[0].mxu0
    %v997 = vadd.f32 0.0, %v996
    %v998 = vpop.f32.mrb[0].mxu0
    %999 = vmatprep.mubr.bf16.mxu0 0
    %1000 = vmatmul.mubr.bf16.gmra.mrb[0].mxu0 %v929
    %v1001 = vpop.f32.mrb[0].mxu0
    %v1002 = vadd.f32 0.0, %v1001
    %v1003 = vpop.f32.mrb[0].mxu0
    %v1004 = vpop.f32.mrb[0].mxu0
    %v1005 = vadd.f32 0.0, %v1004
    %v1006 = vpop.f32.mrb[0].mxu0
    %1007 = vmatprep.mubr.bf16.mxu0 0
    %1008 = vmatmul.mubr.bf16.gmra.mrb[0].mxu0 %v932
    %v1009 = vpop.f32.mrb[0].mxu0
    %v1010 = vadd.f32 0.0, %v1009
    %v1011 = vpop.f32.mrb[0].mxu0
    %v1012 = vpop.f32.mrb[0].mxu0
    %v1013 = vadd.f32 0.0, %v1012
    %v1014 = vpop.f32.mrb[0].mxu0
    %1015 = vmatprep.mubr.bf16.mxu0 0
    %1016 = vmatmul.mubr.bf16.gmra.mrb[0].mxu0 %v935
    %v1017 = vpop.f32.mrb[0].mxu0
    %v1018 = vadd.f32 0.0, %v1017
    %v1019 = vpop.f32.mrb[0].mxu0
    %v1020 = vpop.f32.mrb[0].mxu0
    %v1021 = vadd.f32 0.0, %v1020
    %v1022 = vpop.f32.mrb[0].mxu0
    %1023 = vmatprep.mubr.bf16.mxu0 0
    %1024 = vmatmul.mubr.bf16.gmra.mrb[0].mxu0 %v938
    %v1025 = vpop.f32.mrb[0].mxu0
    %v1026 = vadd.f32 0.0, %v1025
    %v1027 = vpop.f32.mrb[0].mxu0
    %v1028 = vpop.f32.mrb[0].mxu0
    %v1029 = vadd.f32 0.0, %v1028
    %v1030 = vpop.f32.mrb[0].mxu0
    %1031 = vmatprep.mubr.bf16.mxu0 0
    %1032 = vmatmul.mubr.bf16.gmra.mrb[0].mxu0 %v941
    %v1033 = vpop.f32.mrb[0].mxu0
    %v1034 = vadd.f32 0.0, %v1033
    %v1035 = vpop.f32.mrb[0].mxu0
    %v1036 = vpop.f32.mrb[0].mxu0
    %v1037 = vadd.f32 0.0, %v1036
    %v1038 = vpop.f32.mrb[0].mxu0
    %1039 = vdwg.mxu0
    %v1040 = vadd.f32 %v845, %v978
    %v1041 = vadd.f32 %v846, %v981
    %v1042 = vadd.f32 %v847, %v986
    %v1043 = vadd.f32 %v848, %v989
    %v1044 = vadd.f32 %v849, %v994
    %v1045 = vadd.f32 %v850, %v997
    %v1046 = vadd.f32 %v851, %v1002
    %v1047 = vadd.f32 %v852, %v1005
    %v1048 = vadd.f32 %v853, %v1010
    %v1049 = vadd.f32 %v854, %v1013
    %v1050 = vadd.f32 %v855, %v1018
    %v1051 = vadd.f32 %v856, %v1021
    %v1052 = vadd.f32 %v857, %v1026
    %v1053 = vadd.f32 %v858, %v1029
    %v1054 = vadd.f32 %v859, %v1034
    %v1055 = vadd.f32 %v860, %v1037
    %v1056 = vld [vmem:[%s2] sm:$0x1]
    %v1058 = vlaneseq
    %v1059 = vshrl.u32 %v1058, 7
    %v1060 = vsub.s32 0, %v1059
    %v1061 = vrot.slane %v1056, %v1060
    %v1063 = vadd.f32 %v1040, %v1061
    %v1064 = vadd.f32 %v1041, %v1061
    %v1065 = vadd.f32 %v1042, %v1061
    %v1066 = vadd.f32 %v1043, %v1061
    %v1067 = vadd.f32 %v1044, %v1061
    %v1068 = vadd.f32 %v1045, %v1061
    %v1069 = vadd.f32 %v1046, %v1061
    %v1070 = vadd.f32 %v1047, %v1061
    %v1071 = vadd.f32 %v1048, %v1061
    %v1072 = vadd.f32 %v1049, %v1061
    %v1073 = vadd.f32 %v1050, %v1061
    %v1074 = vadd.f32 %v1051, %v1061
    %v1075 = vadd.f32 %v1052, %v1061
    %v1076 = vadd.f32 %v1053, %v1061
    %v1077 = vadd.f32 %v1054, %v1061
    %v1078 = vadd.f32 %v1055, %v1061
    %v1079 = vmax.f32 %v1063, 0.0
    %v1080 = vmax.f32 %v1064, 0.0
    %v1081 = vmax.f32 %v1065, 0.0
    %v1082 = vmax.f32 %v1066, 0.0
    %v1083 = vmax.f32 %v1067, 0.0
    %v1084 = vmax.f32 %v1068, 0.0
    %v1085 = vmax.f32 %v1069, 0.0
    %v1086 = vmax.f32 %v1070, 0.0
    %v1087 = vmax.f32 %v1071, 0.0
    %v1088 = vmax.f32 %v1072, 0.0
    %v1089 = vmax.f32 %v1073, 0.0
    %v1090 = vmax.f32 %v1074, 0.0
    %v1091 = vmax.f32 %v1075, 0.0
    %v1092 = vmax.f32 %v1076, 0.0
    %v1093 = vmax.f32 %v1077, 0.0
    %v1094 = vmax.f32 %v1078, 0.0
    %v1095 = vld [vmem:[#allocation7] sm:$0xff]
    %v1096 = vld [vmem:[#allocation7 + $0x8] sm:$0xff]
    %v1097 = vmul.f32 %v1079, %v1095
    %v1098 = vmul.f32 %v1080, %v1096
    %v1099 = vmul.f32 %v1081, %v1095
    %v1100 = vmul.f32 %v1082, %v1096
    %v1101 = vmul.f32 %v1083, %v1095
    %v1102 = vmul.f32 %v1084, %v1096
    %v1103 = vmul.f32 %v1085, %v1095
    %v1104 = vmul.f32 %v1086, %v1096
    %v1105 = vmul.f32 %v1087, %v1095
    %v1106 = vmul.f32 %v1088, %v1096
    %v1107 = vmul.f32 %v1089, %v1095
    %v1108 = vmul.f32 %v1090, %v1096
    %v1109 = vmul.f32 %v1091, %v1095
    %v1110 = vmul.f32 %v1092, %v1096
    %v1111 = vmul.f32 %v1093, %v1095
    %v1112 = vmul.f32 %v1094, %v1096
    %v1113 = vmax.f32 %v1097, %v1098
    %v1114 = vrot.slane %v1113, 4
    %v1115 = vmax.f32 %v1113, %v1114
    %v1116 = vrot.slane %v1115, 2
    %v1117 = vmax.f32 %v1115, %v1116
    %v1118 = vrot.slane %v1117, 1
    %v1119 = vmax.f32 %v1117, %v1118
    %v1120 = vmax.f32 %v1099, %v1100
    %v1121 = vrot.slane %v1120, 4
    %v1122 = vmax.f32 %v1120, %v1121
    %v1123 = vrot.slane %v1122, 2
    %v1124 = vmax.f32 %v1122, %v1123
    %v1125 = vrot.slane %v1124, 1
    %v1126 = vmax.f32 %v1124, %v1125
    %v1127 = vmax.f32 %v1101, %v1102
    %v1128 = vrot.slane %v1127, 4
    %v1129 = vmax.f32 %v1127, %v1128
    %v1130 = vrot.slane %v1129, 2
    %v1131 = vmax.f32 %v1129, %v1130
    %v1132 = vrot.slane %v1131, 1
    %v1133 = vmax.f32 %v1131, %v1132
    %v1134 = vmax.f32 %v1103, %v1104
    %v1135 = vrot.slane %v1134, 4
    %v1136 = vmax.f32 %v1134, %v1135
    %v1137 = vrot.slane %v1136, 2
    %v1138 = vmax.f32 %v1136, %v1137
    %v1139 = vrot.slane %v1138, 1
    %v1140 = vmax.f32 %v1138, %v1139
    %v1141 = vmax.f32 %v1105, %v1106
    %v1142 = vrot.slane %v1141, 4
    %v1143 = vmax.f32 %v1141, %v1142
    %v1144 = vrot.slane %v1143, 2
    %v1145 = vmax.f32 %v1143, %v1144
    %v1146 = vrot.slane %v1145, 1
    %v1147 = vmax.f32 %v1145, %v1146
    %v1148 = vmax.f32 %v1107, %v1108
    %v1149 = vrot.slane %v1148, 4
    %v1150 = vmax.f32 %v1148, %v1149
    %v1151 = vrot.slane %v1150, 2
    %v1152 = vmax.f32 %v1150, %v1151
    %v1153 = vrot.slane %v1152, 1
    %v1154 = vmax.f32 %v1152, %v1153
    %v1155 = vmax.f32 %v1109, %v1110
    %v1156 = vrot.slane %v1155, 4
    %v1157 = vmax.f32 %v1155, %v1156
    %v1158 = vrot.slane %v1157, 2
    %v1159 = vmax.f32 %v1157, %v1158
    %v1160 = vrot.slane %v1159, 1
    %v1161 = vmax.f32 %v1159, %v1160
    %v1162 = vmax.f32 %v1111, %v1112
    %v1163 = vrot.slane %v1162, 4
    %v1164 = vmax.f32 %v1162, %v1163
    %v1165 = vrot.slane %v1164, 2
    %v1166 = vmax.f32 %v1164, %v1165
    %v1167 = vrot.slane %v1166, 1
    %v1168 = vmax.f32 %v1166, %v1167
    %v1169 = vpack.c.bf16 %v1119, %v1119
    %v1170 = vpack.c.bf16 %v1126, %v1126
    %v1171 = vpack.c.bf16 %v1133, %v1133
    %v1172 = vpack.c.bf16 %v1140, %v1140
    %v1173 = vpack.c.bf16 %v1147, %v1147
    %v1174 = vpack.c.bf16 %v1154, %v1154
    %v1175 = vpack.c.bf16 %v1161, %v1161
    %v1176 = vpack.c.bf16 %v1168, %v1168
    %v1177 = vld [vmem:[#allocation8] sm:$0xf]
    %v1178 = vld [vmem:[#allocation8 + $0x4] sm:$0xf]
    %v1179 = vld [vmem:[#allocation8 + $0x8] sm:$0xf]
    %v1180 = vld [vmem:[#allocation8 + $0xc] sm:$0xf]
    %v1181 = vld [vmem:[#allocation8 + $0x10] sm:$0xf]
    %v1182 = vld [vmem:[#allocation8 + $0x14] sm:$0xf]
    %v1183 = vld [vmem:[#allocation8 + $0x18] sm:$0xf]
    %v1184 = vld [vmem:[#allocation8 + $0x1c] sm:$0xf]
    %v1185 = vld [vmem:[#allocation8 + $0x20] sm:$0xf]
    %v1186 = vld [vmem:[#allocation8 + $0x24] sm:$0xf]
    %v1187 = vld [vmem:[#allocation8 + $0x28] sm:$0xf]
    %v1188 = vld [vmem:[#allocation8 + $0x2c] sm:$0xf]
    %v1189 = vld [vmem:[#allocation8 + $0x30] sm:$0xf]
    %v1190 = vld [vmem:[#allocation8 + $0x34] sm:$0xf]
    %v1191 = vld [vmem:[#allocation8 + $0x38] sm:$0xf]
    %v1192 = vld [vmem:[#allocation8 + $0x3c] sm:$0xf]
    %v1193 = vld [vmem:[%s5] sm:$0x1]
    %v1195 = vlaneseq
    %v1196 = vshrl.u32 %v1195, 7
    %v1197 = vsub.s32 0, %v1196
    %v1198 = vrot.slane %v1193, %v1197
    %v1208 = vunpack.c.l.b16 %v1169
    %v1209 = vunpack.c.l.b16 %v1170
    %v1210 = vunpack.c.l.b16 %v1171
    %v1211 = vunpack.c.l.b16 %v1172
    %v1212 = vunpack.c.l.b16 %v1173
    %v1213 = vunpack.c.l.b16 %v1174
    %v1214 = vunpack.c.l.b16 %v1175
    %v1215 = vunpack.c.l.b16 %v1176
    %vm1216 = vcmask 1041409
    %v1217 = vsel %vm1216, %v1209, %v1208
    %vm1218 = vcmask 1042434
    %v1219 = vsel %vm1218, %v1210, %v1217
    %vm1220 = vcmask 1043459
    %v1221 = vsel %vm1220, %v1211, %v1219
    %vm1222 = vcmask 1044484
    %v1223 = vsel %vm1222, %v1212, %v1221
    %vm1224 = vcmask 1045509
    %v1225 = vsel %vm1224, %v1213, %v1223
    %vm1226 = vcmask 1046534
    %v1227 = vsel %vm1226, %v1214, %v1225
    %vm1228 = vcmask 1047559
    %v1229 = vsel %vm1228, %v1215, %v1227
    %v1230 = vpack.c.b16 %v1229, %v1229
    %v1248 = vunpack.c.l.b16 %v1177
    %v1249 = vunpack.c.l.b16 %v1178
    %v1250 = vunpack.c.l.b16 %v1179
    %v1251 = vunpack.c.l.b16 %v1180
    %v1252 = vunpack.c.l.b16 %v1181
    %v1253 = vunpack.c.l.b16 %v1182
    %v1254 = vunpack.c.l.b16 %v1183
    %v1255 = vunpack.c.l.b16 %v1184
    %v1256 = vunpack.c.l.b16 %v1185
    %v1257 = vunpack.c.l.b16 %v1186
    %v1258 = vunpack.c.l.b16 %v1187
    %v1259 = vunpack.c.l.b16 %v1188
    %v1260 = vunpack.c.l.b16 %v1189
    %v1261 = vunpack.c.l.b16 %v1190
    %v1262 = vunpack.c.l.b16 %v1191
    %v1263 = vunpack.c.l.b16 %v1192
    %v1264 = vpack.c.b16 %v1249, %v1248
    %v1265 = vpack.c.b16 %v1251, %v1250
    %v1266 = vpack.c.b16 %v1253, %v1252
    %v1267 = vpack.c.b16 %v1255, %v1254
    %v1268 = vpack.c.b16 %v1257, %v1256
    %v1269 = vpack.c.b16 %v1259, %v1258
    %v1270 = vpack.c.b16 %v1261, %v1260
    %v1271 = vpack.c.b16 %v1263, %v1262
    %1280 = vmatprep.subr.bf16.mxu0 0
    %1281 = vmatpush1.bf16.msra.mxu0 %v1264
    %1282 = vmatprep.subr.bf16.mxu0 0
    %1283 = vmatpush1.bf16.msra.mxu0 %v1265
    %1284 = vmatprep.subr.bf16.mxu0 0
    %1285 = vmatpush1.bf16.msra.mxu0 %v1266
    %1286 = vmatprep.subr.bf16.mxu0 0
    %1287 = vmatpush1.bf16.msra.mxu0 %v1267
    %1288 = vmatprep.subr.bf16.mxu0 0
    %1289 = vmatpush1.bf16.msra.mxu0 %v1268
    %1290 = vmatprep.subr.bf16.mxu0 0
    %1291 = vmatpush1.bf16.msra.mxu0 %v1269
    %1292 = vmatprep.subr.bf16.mxu0 0
    %1293 = vmatpush1.bf16.msra.mxu0 %v1270
    %1294 = vmatprep.subr.bf16.mxu0 0
    %1295 = vmatpush1.bf16.msra.mxu0 %v1271
    %1296 = vmatprep.subr.bf16.mxu0 0
    %1297 = vmatpush1.bf16.msra.mxu0 0
    %1298 = vmatprep.subr.bf16.mxu0 0
    %1299 = vmatpush1.bf16.msra.mxu0 0
    %1300 = vmatprep.subr.bf16.mxu0 0
    %1301 = vmatpush1.bf16.msra.mxu0 0
    %1302 = vmatprep.subr.bf16.mxu0 0
    %1303 = vmatpush1.bf16.msra.mxu0 0
    %1304 = vmatprep.subr.bf16.mxu0 0
    %1305 = vmatpush1.bf16.msra.mxu0 0
    %1306 = vmatprep.subr.bf16.mxu0 0
    %1307 = vmatpush1.bf16.msra.mxu0 0
    %1308 = vmatprep.subr.bf16.mxu0 0
    %1309 = vmatpush1.bf16.msra.mxu0 0
    %1310 = vmatprep.subr.bf16.mxu0 0
    %1311 = vmatpush1.bf16.msra.mxu0 0
    %1312 = vmatprep.mubr.bf16.mxu0 0
    %1313 = vmatmul.mubr.bf16.gmra.mrb[0].mxu0 %v1230
    %v1314 = vpop.f32.mrb[0].mxu0
    %v1315 = vadd.f32 %v1198, %v1314
    %v1316 = vpop.f32.mrb[0].mxu0
    %v1317 = vpop.f32.mrb[0].mxu0
    %v1318 = vpop.f32.mrb[0].mxu0
    %1319 = vdwg.mxu0
    %1320 = vst [vmem:[#allocation10] sm:$0xff] %v1315
    // Predicated region
    $region42: #{tpu_custom_call.1} parent=1 // pred_check
      _
    $region43: #{tpu_custom_call.1} parent=1 // pred_check_branch
      %1322 = sbr.rel (0) target = $region45
    $region44: #{tpu_custom_call.1} parent=1 // pred_region
      %s1324 = ssub.s32 128, 128
      %1325 = vsyncadd [#allocation4], %s1324
      %s1327 = sshll.u32 [#allocation10], 4
      %s1328 = int_to_ptr.vmem [resolvable:$true] %s1327
      %1330 = dma.vmem_to_hbm [thread:$0]  %s1328, 128, %s6, [#allocation4]
    $region45: #{tpu_custom_call.1} parent=1 // pred_fallthru
      _
    // Predicated region
    $region46: #{tpu_custom_call.1} parent=1 // pred_check
      _
    $region47: #{tpu_custom_call.1} parent=1 // pred_check_branch
      %1332 = sbr.rel (0) target = $region49
    $region48: #{tpu_custom_call.1} parent=1 // pred_region
      %1333 = dma.done [#allocation4], 128
    $region49: #{tpu_custom_call.1} parent=1 // pred_fallthru
      _
    %1334 = vsyncpa [#allocation3], 1
    %1335 = vsyncpa [#allocation6], 1
    %1336 = vsyncpa [#allocation9], 1
    %1337 = vsyncpa [#allocation4], 1

</llo_original>
